<compile_context>
chip_gen: v7x
topology: tpu7x:2x2x1
jax: 0.10.0
libtpu: 0.0.40
codegen_flags: <defaults>
</compile_context>

<pallas_src>
import functools

import numpy as np
import jax
import jax.numpy as jnp
from jax.experimental import pallas as pl
from jax.experimental.pallas import tpu as pltpu


# ============================================================================
# Fused forward kernel: multi-hot encode + state head + action head + latent MLP
# ============================================================================
def _mdq_forward_kernel(
    state_ref, act_ref,
    w_s1_ref, b_s1_ref, w_s2_ref, b_s2_ref,
    w_a1_ref, b_a1_ref, w_a2_ref, b_a2_ref,
    w_l1s_ref, w_l1a_ref, b_l1_ref,
    w_l2_ref, b_l2_ref, w_out_ref, b_out_ref,
    out_ref,
    *, nvec_offsets, action_dim,
):
    f32, bf16 = jnp.float32, jnp.bfloat16
    tb = state_ref.shape[0]

    # --- multi-hot action encoding, built in registers (never hits HBM) -----
    act = act_ref[...]                                            # (TB, C) i32
    lane = jax.lax.broadcasted_iota(jnp.int32, (tb, action_dim), 1)
    enc = jnp.zeros((tb, action_dim), bf16)
    for j, off in enumerate(nvec_offsets):                        # static loop
        enc = enc + (lane == (act[:, j:j + 1] + off)).astype(bf16)  # exact 0/1

    # --- state head: S -> H -> L (ReLU, ReLU); bf16 MXU inputs, f32 accum ---
    h = jnp.dot(state_ref[...].astype(bf16), w_s1_ref[...],
                preferred_element_type=f32) + b_s1_ref[...]
    h = jnp.maximum(h, 0.0)
    h_state = jnp.dot(h.astype(bf16), w_s2_ref[...],
                      preferred_element_type=f32) + b_s2_ref[...]
    h_state = jnp.maximum(h_state, 0.0)                           # (TB, L)

    # --- action head: A -> H -> L (ReLU, ReLU) ------------------------------
    h = jnp.dot(enc, w_a1_ref[...],
                preferred_element_type=f32) + b_a1_ref[...]
    h = jnp.maximum(h, 0.0)
    h_action = jnp.dot(h.astype(bf16), w_a2_ref[...],
                       preferred_element_type=f32) + b_a2_ref[...]
    h_action = jnp.maximum(h_action, 0.0)                         # (TB, L)

    # --- latent MLP: cat(h_state, h_action) @ W1 realized as split matmul ---
    h = (jnp.dot(h_state.astype(bf16), w_l1s_ref[...], preferred_element_type=f32)
         + jnp.dot(h_action.astype(bf16), w_l1a_ref[...], preferred_element_type=f32)
         + b_l1_ref[...])
    h = jnp.maximum(h, 0.0)                                       # (TB, 64)
    h = jnp.dot(h.astype(bf16), w_l2_ref[...],
                preferred_element_type=f32) + b_l2_ref[...]
    h = jnp.maximum(h, 0.0)                                       # (TB, 32)

    # --- final 32 -> 1 projection on the VPU (an N=1 MXU pass wastes >99%) --
    q = jnp.sum(h * w_out_ref[...], axis=-1, keepdims=True) + b_out_ref[...]
    out_ref[...] = q.astype(out_ref.dtype)


def multi_discrete_qnet_forward(state, action_idx, params, nvec, *, block_b=256):
    """Q(state, action_indices) -> (batch, 1); action_idx is in index space."""
    nvec = np.asarray(nvec)
    n_comp = len(nvec)
    action_dim = int(nvec.sum())
    offsets = tuple(int(x) for x in np.concatenate([[0], np.cumsum(nvec)[:-1]]))

    state = jnp.asarray(state, jnp.float32)
    action_idx = jnp.asarray(action_idx, jnp.int32)

    # shape promotion mirroring MultiDiscreteQNet.forward
    if action_idx.ndim == 1:
        action_idx = action_idx[None]
    if state.ndim == 1:
        state = state[None]
    if state.shape[0] == 1 and action_idx.shape[0] > 1:
        state = jnp.broadcast_to(state, (action_idx.shape[0], state.shape[1]))
    elif action_idx.shape[0] == 1 and state.shape[0] > 1:
        action_idx = jnp.broadcast_to(action_idx, (state.shape[0], n_comp))

    batch, state_dim = state.shape
    assert action_idx.shape == (batch, n_comp), action_idx.shape

    # adaptive batch tile: full 256-row tiles at scale, no 50x padded MXU work
    # at tiny batches (sublane rule: tile rows must stay a multiple of 8).
    block_b = int(min(block_b, -(-batch // 8) * 8))
    n_tiles = max(1, -(-batch // block_b))
    b_pad = n_tiles * block_b
    if b_pad != batch:   # padded rows compute garbage, sliced away at the end
        state = jnp.pad(state, ((0, b_pad - batch), (0, 0)))
        action_idx = jnp.pad(action_idx, ((0, b_pad - batch), (0, 0)))

    sh, ah, lm = params["state_head"], params["action_head"], params["latent_mlp"]
    bf16, f32 = jnp.bfloat16, jnp.float32
    latent = sh["w2"].shape[1]

    weights = [
        sh["w1"].astype(bf16), sh["b1"].reshape(1, -1).astype(f32),
        sh["w2"].astype(bf16), sh["b2"].reshape(1, -1).astype(f32),
        ah["w1"].astype(bf16), ah["b1"].reshape(1, -1).astype(f32),
        ah["w2"].astype(bf16), ah["b2"].reshape(1, -1).astype(f32),
        lm["w1"][:latent].astype(bf16), lm["w1"][latent:].astype(bf16),
        lm["b1"].reshape(1, -1).astype(f32),
        lm["w2"].astype(bf16), lm["b2"].reshape(1, -1).astype(f32),
        lm["w3"].reshape(1, -1).astype(f32), lm["b3"].reshape(1, 1).astype(f32),
    ]

    head_h = sh["w1"].shape[1]
    h1, h2 = lm["w2"].shape
    flops_per_row = 2 * (state_dim * head_h + head_h * latent
                         + action_dim * head_h + head_h * latent
                         + 2 * latent * h1 + h1 * h2 + h2)
    bytes_accessed = (int(state.size) * 4 + int(action_idx.size) * 4 + b_pad * 4
                      + sum(int(w.size) * w.dtype.itemsize for w in weights))

    row = lambda i: (i, 0)   # batch-tiled operands
    rep = lambda i: (0, 0)   # weights: resident across the whole grid

    kernel = functools.partial(_mdq_forward_kernel,
                               nvec_offsets=offsets, action_dim=action_dim)

    out = pl.pallas_call(
        kernel,
        out_shape=jax.ShapeDtypeStruct((b_pad, 1), jnp.float32),
        grid=(n_tiles,),
        in_specs=[pl.BlockSpec((block_b, state_dim), row),
                  pl.BlockSpec((block_b, n_comp), row)]
                 + [pl.BlockSpec(w.shape, rep) for w in weights],
        out_specs=pl.BlockSpec((block_b, 1), row),
        compiler_params=pltpu.CompilerParams(
            dimension_semantics=("parallel",),
            vmem_limit_bytes=32 * 1024 * 1024,   # within v7x's 64 MiB physical
        ),
        cost_estimate=pl.CostEstimate(flops=int(flops_per_row) * int(b_pad),
                                      transcendentals=0,
                                      bytes_accessed=int(bytes_accessed)),
    )(state, action_idx, *weights)
    return out[:batch]


def pair_forward(state, actions, params, nvec):
    """(n_states, S) x (n_actions, C) -> (n_states, n_actions, 1), same kernel."""
    state = jnp.asarray(state, jnp.float32)
    actions = jnp.asarray(actions, jnp.int32)
    n_states, n_actions = state.shape[0], actions.shape[0]
    s = jnp.repeat(state, n_actions, axis=0)
    a = jnp.tile(actions, (n_states, 1))
    q = multi_discrete_qnet_forward(s, a, params, nvec)
    return q.reshape(n_states, n_actions, 1)


# ============================================================================
# soft_update: single fused, aliased, lane-dense Polyak-averaging kernel
# ============================================================================
def _soft_update_kernel(target_ref, param_ref, out_ref, *, tau):
    out_ref[...] = target_ref[...] * (1.0 - tau) + param_ref[...] * tau


def soft_update(target_params, params, tau, *, block_rows=256):
    assert 0.0 <= tau <= 1.0, f"tau has to be between 0 and 1, given value: {tau}"
    t_leaves, treedef = jax.tree_util.tree_flatten(target_params)
    p_leaves, treedef_p = jax.tree_util.tree_flatten(params)
    assert treedef == treedef_p

    shapes = [l.shape for l in t_leaves]
    sizes = [int(np.prod(s)) for s in shapes]
    flat_t = jnp.concatenate([l.reshape(-1).astype(jnp.float32) for l in t_leaves])
    flat_p = jnp.concatenate([l.reshape(-1).astype(jnp.float32) for l in p_leaves])

    n = int(flat_t.size)
    lanes = 128
    block_elems = block_rows * lanes
    n_blocks = max(1, -(-n // block_elems))
    n_pad = n_blocks * block_elems
    flat_t = jnp.pad(flat_t, (0, n_pad - n)).reshape(n_pad // lanes, lanes)
    flat_p = jnp.pad(flat_p, (0, n_pad - n)).reshape(n_pad // lanes, lanes)

    spec = pl.BlockSpec((block_rows, lanes), lambda i: (i, 0))
    out = pl.pallas_call(
        functools.partial(_soft_update_kernel, tau=float(tau)),
        out_shape=jax.ShapeDtypeStruct(flat_t.shape, jnp.float32),
        grid=(n_blocks,),
        in_specs=[spec, spec],
        out_specs=spec,
        input_output_aliases={0: 0},   # new target written over the old buffer
        compiler_params=pltpu.CompilerParams(dimension_semantics=("parallel",)),
    )(flat_t, flat_p)

    flat_out = out.reshape(-1)[:n]
    new_leaves, off = [], 0
    for shape, size in zip(shapes, sizes):
        new_leaves.append(flat_out[off:off + size].reshape(shape))
        off += size
    return jax.tree_util.tree_unflatten(treedef, new_leaves)


# ============================================================================
# Parameter init (PyTorch nn.Linear-like uniform init) and a plain-JAX reference
# ============================================================================
def _init_linear(key, fan_in, fan_out):
    kw, kb = jax.random.split(key)
    bound = 1.0 / float(np.sqrt(fan_in))
    w = jax.random.uniform(kw, (fan_in, fan_out), jnp.float32, -bound, bound)
    b = jax.random.uniform(kb, (fan_out,), jnp.float32, -bound, bound)
    return w, b


def init_params(key, state_dim, nvec, latent_dim=128, head_hidden=128,
                latent_hidden=(64, 32)):
    # TODO(synk): only the default FeedForwardNetwork architectures
    # ([128], [128], [64, 32]) are supported by the fused kernel topology.
    action_dim = int(np.sum(nvec))
    ks = jax.random.split(key, 7)
    s_w1, s_b1 = _init_linear(ks[0], state_dim, head_hidden)
    s_w2, s_b2 = _init_linear(ks[1], head_hidden, latent_dim)
    a_w1, a_b1 = _init_linear(ks[2], action_dim, head_hidden)
    a_w2, a_b2 = _init_linear(ks[3], head_hidden, latent_dim)
    l_w1, l_b1 = _init_linear(ks[4], 2 * latent_dim, latent_hidden[0])
    l_w2, l_b2 = _init_linear(ks[5], latent_hidden[0], latent_hidden[1])
    l_w3, l_b3 = _init_linear(ks[6], latent_hidden[1], 1)
    return {
        "state_head": {"w1": s_w1, "b1": s_b1, "w2": s_w2, "b2": s_b2},
        "action_head": {"w1": a_w1, "b1": a_b1, "w2": a_w2, "b2": a_b2},
        "latent_mlp": {"w1": l_w1, "b1": l_b1, "w2": l_w2, "b2": l_b2,
                       "w3": l_w3, "b3": l_b3},
    }


def forward_reference(state, action_idx, params, nvec):
    """Plain-JAX reference using the same bf16-matmul / f32-accumulate recipe."""
    nvec = np.asarray(nvec)
    enc = jnp.concatenate(
        [jax.nn.one_hot(action_idx[:, j], int(n), dtype=jnp.float32)
         for j, n in enumerate(nvec)], axis=-1)

    def lin(x, w, b):
        return jnp.dot(x.astype(jnp.bfloat16), w.astype(jnp.bfloat16),
                       preferred_element_type=jnp.float32) + b

    sh, ah, lm = params["state_head"], params["action_head"], params["latent_mlp"]
    hs = jnp.maximum(lin(state, sh["w1"], sh["b1"]), 0.0)
    hs = jnp.maximum(lin(hs, sh["w2"], sh["b2"]), 0.0)
    ha = jnp.maximum(lin(enc, ah["w1"], ah["b1"]), 0.0)
    ha = jnp.maximum(lin(ha, ah["w2"], ah["b2"]), 0.0)
    lat = jnp.concatenate([hs, ha], axis=-1)
    h = jnp.maximum(lin(lat, lm["w1"], lm["b1"]), 0.0)
    h = jnp.maximum(lin(h, lm["w2"], lm["b2"]), 0.0)
    return h @ lm["w3"] + lm["b3"]


if __name__ == "__main__":
    # TODO(synk): train_net is abstract in the PyTorch base class; mc_forward /
    # complete_forward / the memory_optimization loop are host-side batching
    # conveniences over the same forward kernel and are not reproduced here.
    state_dim = 16
    nvec = np.array([3, 4, 5])            # action_dim = sum(nvec) = 12
    batch = 5

    key = jax.random.PRNGKey(0)
    k_s, k_a, k_p, k_t = jax.random.split(key, 4)
    state = jax.random.normal(k_s, (batch, state_dim), jnp.float32)
    action = jnp.stack(
        [jax.random.randint(jax.random.fold_in(k_a, j), (batch,), 0, int(n))
         for j, n in enumerate(nvec)], axis=-1)                   # (batch, 3)

    params = init_params(k_p, state_dim, nvec)
    target_params = init_params(k_t, state_dim, nvec)

    # --- fused forward kernel -------------------------------------------------
    q = multi_discrete_qnet_forward(state, action, params, nvec)
    q = jax.block_until_ready(q)
    assert q.shape == (batch, 1), q.shape

    q_ref = forward_reference(state, action, params, nvec)
    assert jnp.allclose(q, q_ref, atol=2e-2, rtol=2e-2), (q, q_ref)

    # single unbatched (state, action) pair exercises the 1-D promotion path.
    q1 = jax.block_until_ready(
        multi_discrete_qnet_forward(state[0], action[0], params, nvec))
    assert q1.shape == (1, 1), q1.shape

    # pair_forward: every state scored against every action (same kernel).
    q_pair = jax.block_until_ready(pair_forward(state, action, params, nvec))
    assert q_pair.shape == (batch, batch, 1), q_pair.shape
    diag = q_pair[jnp.arange(batch), jnp.arange(batch), :]
    assert jnp.allclose(diag, q, atol=1e-5), (diag, q)

    # --- fused, aliased soft_update kernel -------------------------------------
    tau = 0.1
    new_target = soft_update(target_params, params, tau)
    new_target = jax.block_until_ready(new_target)
    ref_target = jax.tree_util.tree_map(
        lambda t, p: t * (1.0 - tau) + p * tau, target_params, params)
    for got, want in zip(jax.tree_util.tree_leaves(new_target),
                         jax.tree_util.tree_leaves(ref_target)):
        assert got.shape == want.shape
        assert jnp.allclose(got, want, atol=1e-6)

    print("KERNEL_OK")
</pallas_src>

<mosaic_0001>
module attributes {stable_mosaic.version = 11 : i64} {
  func.func @_mdq_forward_kernel(%arg0: i32, %arg1: memref<8x16xf32, #tpu.memory_space<vmem>>, %arg2: memref<8x3xi32, #tpu.memory_space<vmem>>, %arg3: memref<16x128xbf16, #tpu.memory_space<vmem>>, %arg4: memref<1x128xf32, #tpu.memory_space<vmem>>, %arg5: memref<128x128xbf16, #tpu.memory_space<vmem>>, %arg6: memref<1x128xf32, #tpu.memory_space<vmem>>, %arg7: memref<12x128xbf16, #tpu.memory_space<vmem>>, %arg8: memref<1x128xf32, #tpu.memory_space<vmem>>, %arg9: memref<128x128xbf16, #tpu.memory_space<vmem>>, %arg10: memref<1x128xf32, #tpu.memory_space<vmem>>, %arg11: memref<128x64xbf16, #tpu.memory_space<vmem>>, %arg12: memref<128x64xbf16, #tpu.memory_space<vmem>>, %arg13: memref<1x64xf32, #tpu.memory_space<vmem>>, %arg14: memref<64x32xbf16, #tpu.memory_space<vmem>>, %arg15: memref<1x32xf32, #tpu.memory_space<vmem>>, %arg16: memref<1x32xf32, #tpu.memory_space<vmem>>, %arg17: memref<1x1xf32, #tpu.memory_space<vmem>>, %arg18: memref<8x1xf32, #tpu.memory_space<vmem>>) attributes {dimension_semantics = [#tpu.dimension_semantics<parallel>], iteration_bounds = array<i64: 1>, scalar_prefetch = 0 : i64, scratch_operands = 0 : i64, tpu.core_type = #tpu.core_type<tc>, window_params = [{transform_indices = @transform_0, window_bounds = array<i64: 8, 16>}, {transform_indices = @transform_1, window_bounds = array<i64: 8, 3>}, {pipeline_mode = #tpu.pipeline_mode<synchronous>, transform_indices = @transform_2, window_bounds = array<i64: 16, 128>}, {pipeline_mode = #tpu.pipeline_mode<synchronous>, transform_indices = @transform_3, window_bounds = array<i64: 1, 128>}, {pipeline_mode = #tpu.pipeline_mode<synchronous>, transform_indices = @transform_4, window_bounds = array<i64: 128, 128>}, {pipeline_mode = #tpu.pipeline_mode<synchronous>, transform_indices = @transform_5, window_bounds = array<i64: 1, 128>}, {pipeline_mode = #tpu.pipeline_mode<synchronous>, transform_indices = @transform_6, window_bounds = array<i64: 12, 128>}, {pipeline_mode = #tpu.pipeline_mode<synchronous>, transform_indices = @transform_7, window_bounds = array<i64: 1, 128>}, {pipeline_mode = #tpu.pipeline_mode<synchronous>, transform_indices = @transform_8, window_bounds = array<i64: 128, 128>}, {pipeline_mode = #tpu.pipeline_mode<synchronous>, transform_indices = @transform_9, window_bounds = array<i64: 1, 128>}, {pipeline_mode = #tpu.pipeline_mode<synchronous>, transform_indices = @transform_10, window_bounds = array<i64: 128, 64>}, {pipeline_mode = #tpu.pipeline_mode<synchronous>, transform_indices = @transform_11, window_bounds = array<i64: 128, 64>}, {pipeline_mode = #tpu.pipeline_mode<synchronous>, transform_indices = @transform_12, window_bounds = array<i64: 1, 64>}, {pipeline_mode = #tpu.pipeline_mode<synchronous>, transform_indices = @transform_13, window_bounds = array<i64: 64, 32>}, {pipeline_mode = #tpu.pipeline_mode<synchronous>, transform_indices = @transform_14, window_bounds = array<i64: 1, 32>}, {pipeline_mode = #tpu.pipeline_mode<synchronous>, transform_indices = @transform_15, window_bounds = array<i64: 1, 32>}, {pipeline_mode = #tpu.pipeline_mode<synchronous>, transform_indices = @transform_16, window_bounds = array<i64: 1, 1>}, {transform_indices = @transform_17, window_bounds = array<i64: 8, 1>}]} {
    %c0 = arith.constant 0 : index
    %c0_0 = arith.constant 0 : index
    %0 = vector.load %arg2[%c0, %c0_0] : memref<8x3xi32, #tpu.memory_space<vmem>>, vector<8x3xi32>
    %1 = tpu.iota {dimensions = array<i32: 1>} : vector<8x12xi32>
    %cst = arith.constant 0.000000e+00 : bf16
    %2 = vector.broadcast %cst : bf16 to vector<8x12xbf16>
    %3 = vector.extract_strided_slice %0 {offsets = [0, 0], sizes = [8, 1], strides = [1, 1]} : vector<8x3xi32> to vector<8x1xi32>
    %c0_i32 = arith.constant 0 : i32
    %4 = vector.broadcast %c0_i32 : i32 to vector<8x1xi32>
    %5 = arith.addi %3, %4 : vector<8x1xi32>
    %6 = vector.broadcast %5 : vector<8x1xi32> to vector<8x12xi32>
    %7 = arith.cmpi eq, %1, %6 : vector<8x12xi32>
    %8 = arith.extui %7 : vector<8x12xi1> to vector<8x12xi32>
    %9 = arith.sitofp %8 : vector<8x12xi32> to vector<8x12xf32>
    %10 = arith.truncf %9 : vector<8x12xf32> to vector<8x12xbf16>
    %11 = arith.addf %2, %10 : vector<8x12xbf16>
    %12 = vector.extract_strided_slice %0 {offsets = [0, 1], sizes = [8, 1], strides = [1, 1]} : vector<8x3xi32> to vector<8x1xi32>
    %c3_i32 = arith.constant 3 : i32
    %13 = vector.broadcast %c3_i32 : i32 to vector<8x1xi32>
    %14 = arith.addi %12, %13 : vector<8x1xi32>
    %15 = vector.broadcast %14 : vector<8x1xi32> to vector<8x12xi32>
    %16 = arith.cmpi eq, %1, %15 : vector<8x12xi32>
    %17 = arith.extui %16 : vector<8x12xi1> to vector<8x12xi32>
    %18 = arith.sitofp %17 : vector<8x12xi32> to vector<8x12xf32>
    %19 = arith.truncf %18 : vector<8x12xf32> to vector<8x12xbf16>
    %20 = arith.addf %11, %19 : vector<8x12xbf16>
    %21 = vector.extract_strided_slice %0 {offsets = [0, 2], sizes = [8, 1], strides = [1, 1]} : vector<8x3xi32> to vector<8x1xi32>
    %c7_i32 = arith.constant 7 : i32
    %22 = vector.broadcast %c7_i32 : i32 to vector<8x1xi32>
    %23 = arith.addi %21, %22 : vector<8x1xi32>
    %24 = vector.broadcast %23 : vector<8x1xi32> to vector<8x12xi32>
    %25 = arith.cmpi eq, %1, %24 : vector<8x12xi32>
    %26 = arith.extui %25 : vector<8x12xi1> to vector<8x12xi32>
    %27 = arith.sitofp %26 : vector<8x12xi32> to vector<8x12xf32>
    %28 = arith.truncf %27 : vector<8x12xf32> to vector<8x12xbf16>
    %29 = arith.addf %20, %28 : vector<8x12xbf16>
    %c0_1 = arith.constant 0 : index
    %c0_2 = arith.constant 0 : index
    %30 = vector.load %arg1[%c0_1, %c0_2] : memref<8x16xf32, #tpu.memory_space<vmem>>, vector<8x16xf32>
    %31 = arith.truncf %30 : vector<8x16xf32> to vector<8x16xbf16>
    %c0_3 = arith.constant 0 : index
    %c0_4 = arith.constant 0 : index
    %32 = vector.load %arg3[%c0_3, %c0_4] : memref<16x128xbf16, #tpu.memory_space<vmem>>, vector<16x128xbf16>
    %cst_5 = arith.constant dense<0.000000e+00> : vector<8x128xf32>
    %33 = tpu.matmul %31, %32, %cst_5 {dimension_numbers = #tpu.dot_dimension_numbers<[1], [0], [0], [1], [0, 0, 1, 1], [], []>} : vector<8x16xbf16>, vector<16x128xbf16>, vector<8x128xf32> -> vector<8x128xf32>
    %c0_6 = arith.constant 0 : index
    %c0_7 = arith.constant 0 : index
    %34 = vector.load %arg4[%c0_6, %c0_7] : memref<1x128xf32, #tpu.memory_space<vmem>>, vector<1x128xf32>
    %35 = vector.broadcast %34 : vector<1x128xf32> to vector<8x128xf32>
    %36 = arith.addf %33, %35 : vector<8x128xf32>
    %cst_8 = arith.constant 0.000000e+00 : f32
    %37 = vector.broadcast %cst_8 : f32 to vector<8x128xf32>
    %38 = arith.maximumf %36, %37 : vector<8x128xf32>
    %39 = arith.truncf %38 : vector<8x128xf32> to vector<8x128xbf16>
    %c0_9 = arith.constant 0 : index
    %c0_10 = arith.constant 0 : index
    %40 = vector.load %arg5[%c0_9, %c0_10] : memref<128x128xbf16, #tpu.memory_space<vmem>>, vector<128x128xbf16>
    %cst_11 = arith.constant dense<0.000000e+00> : vector<8x128xf32>
    %41 = tpu.matmul %39, %40, %cst_11 {dimension_numbers = #tpu.dot_dimension_numbers<[1], [0], [0], [1], [0, 0, 1, 1], [], []>} : vector<8x128xbf16>, vector<128x128xbf16>, vector<8x128xf32> -> vector<8x128xf32>
    %c0_12 = arith.constant 0 : index
    %c0_13 = arith.constant 0 : index
    %42 = vector.load %arg6[%c0_12, %c0_13] : memref<1x128xf32, #tpu.memory_space<vmem>>, vector<1x128xf32>
    %43 = vector.broadcast %42 : vector<1x128xf32> to vector<8x128xf32>
    %44 = arith.addf %41, %43 : vector<8x128xf32>
    %cst_14 = arith.constant 0.000000e+00 : f32
    %45 = vector.broadcast %cst_14 : f32 to vector<8x128xf32>
    %46 = arith.maximumf %44, %45 : vector<8x128xf32>
    %c0_15 = arith.constant 0 : index
    %c0_16 = arith.constant 0 : index
    %47 = vector.load %arg7[%c0_15, %c0_16] : memref<12x128xbf16, #tpu.memory_space<vmem>>, vector<12x128xbf16>
    %cst_17 = arith.constant dense<0.000000e+00> : vector<8x128xf32>
    %48 = tpu.matmul %29, %47, %cst_17 {dimension_numbers = #tpu.dot_dimension_numbers<[1], [0], [0], [1], [0, 0, 1, 1], [], []>} : vector<8x12xbf16>, vector<12x128xbf16>, vector<8x128xf32> -> vector<8x128xf32>
    %c0_18 = arith.constant 0 : index
    %c0_19 = arith.constant 0 : index
    %49 = vector.load %arg8[%c0_18, %c0_19] : memref<1x128xf32, #tpu.memory_space<vmem>>, vector<1x128xf32>
    %50 = vector.broadcast %49 : vector<1x128xf32> to vector<8x128xf32>
    %51 = arith.addf %48, %50 : vector<8x128xf32>
    %cst_20 = arith.constant 0.000000e+00 : f32
    %52 = vector.broadcast %cst_20 : f32 to vector<8x128xf32>
    %53 = arith.maximumf %51, %52 : vector<8x128xf32>
    %54 = arith.truncf %53 : vector<8x128xf32> to vector<8x128xbf16>
    %c0_21 = arith.constant 0 : index
    %c0_22 = arith.constant 0 : index
    %55 = vector.load %arg9[%c0_21, %c0_22] : memref<128x128xbf16, #tpu.memory_space<vmem>>, vector<128x128xbf16>
    %cst_23 = arith.constant dense<0.000000e+00> : vector<8x128xf32>
    %56 = tpu.matmul %54, %55, %cst_23 {dimension_numbers = #tpu.dot_dimension_numbers<[1], [0], [0], [1], [0, 0, 1, 1], [], []>} : vector<8x128xbf16>, vector<128x128xbf16>, vector<8x128xf32> -> vector<8x128xf32>
    %c0_24 = arith.constant 0 : index
    %c0_25 = arith.constant 0 : index
    %57 = vector.load %arg10[%c0_24, %c0_25] : memref<1x128xf32, #tpu.memory_space<vmem>>, vector<1x128xf32>
    %58 = vector.broadcast %57 : vector<1x128xf32> to vector<8x128xf32>
    %59 = arith.addf %56, %58 : vector<8x128xf32>
    %cst_26 = arith.constant 0.000000e+00 : f32
    %60 = vector.broadcast %cst_26 : f32 to vector<8x128xf32>
    %61 = arith.maximumf %59, %60 : vector<8x128xf32>
    %62 = arith.truncf %46 : vector<8x128xf32> to vector<8x128xbf16>
    %c0_27 = arith.constant 0 : index
    %c0_28 = arith.constant 0 : index
    %63 = vector.load %arg11[%c0_27, %c0_28] : memref<128x64xbf16, #tpu.memory_space<vmem>>, vector<128x64xbf16>
    %cst_29 = arith.constant dense<0.000000e+00> : vector<8x64xf32>
    %64 = tpu.matmul %62, %63, %cst_29 {dimension_numbers = #tpu.dot_dimension_numbers<[1], [0], [0], [1], [0, 0, 1, 1], [], []>} : vector<8x128xbf16>, vector<128x64xbf16>, vector<8x64xf32> -> vector<8x64xf32>
    %65 = arith.truncf %61 : vector<8x128xf32> to vector<8x128xbf16>
    %c0_30 = arith.constant 0 : index
    %c0_31 = arith.constant 0 : index
    %66 = vector.load %arg12[%c0_30, %c0_31] : memref<128x64xbf16, #tpu.memory_space<vmem>>, vector<128x64xbf16>
    %cst_32 = arith.constant dense<0.000000e+00> : vector<8x64xf32>
    %67 = tpu.matmul %65, %66, %cst_32 {dimension_numbers = #tpu.dot_dimension_numbers<[1], [0], [0], [1], [0, 0, 1, 1], [], []>} : vector<8x128xbf16>, vector<128x64xbf16>, vector<8x64xf32> -> vector<8x64xf32>
    %68 = arith.addf %64, %67 : vector<8x64xf32>
    %c0_33 = arith.constant 0 : index
    %c0_34 = arith.constant 0 : index
    %69 = vector.load %arg13[%c0_33, %c0_34] : memref<1x64xf32, #tpu.memory_space<vmem>>, vector<1x64xf32>
    %70 = vector.broadcast %69 : vector<1x64xf32> to vector<8x64xf32>
    %71 = arith.addf %68, %70 : vector<8x64xf32>
    %cst_35 = arith.constant 0.000000e+00 : f32
    %72 = vector.broadcast %cst_35 : f32 to vector<8x64xf32>
    %73 = arith.maximumf %71, %72 : vector<8x64xf32>
    %74 = arith.truncf %73 : vector<8x64xf32> to vector<8x64xbf16>
    %c0_36 = arith.constant 0 : index
    %c0_37 = arith.constant 0 : index
    %75 = vector.load %arg14[%c0_36, %c0_37] : memref<64x32xbf16, #tpu.memory_space<vmem>>, vector<64x32xbf16>
    %cst_38 = arith.constant dense<0.000000e+00> : vector<8x32xf32>
    %76 = tpu.matmul %74, %75, %cst_38 {dimension_numbers = #tpu.dot_dimension_numbers<[1], [0], [0], [1], [0, 0, 1, 1], [], []>} : vector<8x64xbf16>, vector<64x32xbf16>, vector<8x32xf32> -> vector<8x32xf32>
    %c0_39 = arith.constant 0 : index
    %c0_40 = arith.constant 0 : index
    %77 = vector.load %arg15[%c0_39, %c0_40] : memref<1x32xf32, #tpu.memory_space<vmem>>, vector<1x32xf32>
    %78 = vector.broadcast %77 : vector<1x32xf32> to vector<8x32xf32>
    %79 = arith.addf %76, %78 : vector<8x32xf32>
    %cst_41 = arith.constant 0.000000e+00 : f32
    %80 = vector.broadcast %cst_41 : f32 to vector<8x32xf32>
    %81 = arith.maximumf %79, %80 : vector<8x32xf32>
    %c0_42 = arith.constant 0 : index
    %c0_43 = arith.constant 0 : index
    %82 = vector.load %arg16[%c0_42, %c0_43] : memref<1x32xf32, #tpu.memory_space<vmem>>, vector<1x32xf32>
    %83 = vector.broadcast %82 : vector<1x32xf32> to vector<8x32xf32>
    %84 = arith.mulf %81, %83 : vector<8x32xf32>
    %cst_44 = arith.constant dense<0.000000e+00> : vector<8xf32>
    %85 = vector.multi_reduction <add>, %84, %cst_44 [1] : vector<8x32xf32> to vector<8xf32>
    %86 = vector.shape_cast %85 : vector<8xf32> to vector<8x1xf32>
    %c0_45 = arith.constant 0 : index
    %c0_46 = arith.constant 0 : index
    %87 = vector.load %arg17[%c0_45, %c0_46] : memref<1x1xf32, #tpu.memory_space<vmem>>, vector<1x1xf32>
    %88 = vector.broadcast %87 : vector<1x1xf32> to vector<8x1xf32>
    %89 = arith.addf %86, %88 : vector<8x1xf32>
    %c0_47 = arith.constant 0 : index
    %c0_48 = arith.constant 0 : index
    %90 = vector.load %arg18[%c0_47, %c0_48] : memref<8x1xf32, #tpu.memory_space<vmem>>, vector<8x1xf32>
    tpu.vector_store %arg18[%c0_47, %c0_48], %89 {strides = array<i32>} : memref<8x1xf32, #tpu.memory_space<vmem>>, vector<8x1xf32>,
    return
  }
  func.func @transform_0(%arg0: i32) -> (i32, i32) {
    %c0_i32 = arith.constant 0 : i32
    %c0_i32_0 = arith.constant 0 : i32
    return %arg0, %c0_i32 : i32, i32
  }
  func.func @transform_1(%arg0: i32) -> (i32, i32) {
    %c0_i32 = arith.constant 0 : i32
    %c0_i32_0 = arith.constant 0 : i32
    return %arg0, %c0_i32 : i32, i32
  }
  func.func @transform_2(%arg0: i32) -> (i32, i32) {
    %c0_i32 = arith.constant 0 : i32
    %c0_i32_0 = arith.constant 0 : i32
    %c0_i32_1 = arith.constant 0 : i32
    return %c0_i32, %c0_i32_0 : i32, i32
  }
  func.func @transform_3(%arg0: i32) -> (i32, i32) {
    %c0_i32 = arith.constant 0 : i32
    %c0_i32_0 = arith.constant 0 : i32
    %c0_i32_1 = arith.constant 0 : i32
    return %c0_i32, %c0_i32_0 : i32, i32
  }
  func.func @transform_4(%arg0: i32) -> (i32, i32) {
    %c0_i32 = arith.constant 0 : i32
    %c0_i32_0 = arith.constant 0 : i32
    %c0_i32_1 = arith.constant 0 : i32
    return %c0_i32, %c0_i32_0 : i32, i32
  }
  func.func @transform_5(%arg0: i32) -> (i32, i32) {
    %c0_i32 = arith.constant 0 : i32
    %c0_i32_0 = arith.constant 0 : i32
    %c0_i32_1 = arith.constant 0 : i32
    return %c0_i32, %c0_i32_0 : i32, i32
  }
  func.func @transform_6(%arg0: i32) -> (i32, i32) {
    %c0_i32 = arith.constant 0 : i32
    %c0_i32_0 = arith.constant 0 : i32
    %c0_i32_1 = arith.constant 0 : i32
    return %c0_i32, %c0_i32_0 : i32, i32
  }
  func.func @transform_7(%arg0: i32) -> (i32, i32) {
    %c0_i32 = arith.constant 0 : i32
    %c0_i32_0 = arith.constant 0 : i32
    %c0_i32_1 = arith.constant 0 : i32
    return %c0_i32, %c0_i32_0 : i32, i32
  }
  func.func @transform_8(%arg0: i32) -> (i32, i32) {
    %c0_i32 = arith.constant 0 : i32
    %c0_i32_0 = arith.constant 0 : i32
    %c0_i32_1 = arith.constant 0 : i32
    return %c0_i32, %c0_i32_0 : i32, i32
  }
  func.func @transform_9(%arg0: i32) -> (i32, i32) {
    %c0_i32 = arith.constant 0 : i32
    %c0_i32_0 = arith.constant 0 : i32
    %c0_i32_1 = arith.constant 0 : i32
    return %c0_i32, %c0_i32_0 : i32, i32
  }
  func.func @transform_10(%arg0: i32) -> (i32, i32) {
    %c0_i32 = arith.constant 0 : i32
    %c0_i32_0 = arith.constant 0 : i32
    %c0_i32_1 = arith.constant 0 : i32
    return %c0_i32, %c0_i32_0 : i32, i32
  }
  func.func @transform_11(%arg0: i32) -> (i32, i32) {
    %c0_i32 = arith.constant 0 : i32
    %c0_i32_0 = arith.constant 0 : i32
    %c0_i32_1 = arith.constant 0 : i32
    return %c0_i32, %c0_i32_0 : i32, i32
  }
  func.func @transform_12(%arg0: i32) -> (i32, i32) {
    %c0_i32 = arith.constant 0 : i32
    %c0_i32_0 = arith.constant 0 : i32
    %c0_i32_1 = arith.constant 0 : i32
    return %c0_i32, %c0_i32_0 : i32, i32
  }
  func.func @transform_13(%arg0: i32) -> (i32, i32) {
    %c0_i32 = arith.constant 0 : i32
    %c0_i32_0 = arith.constant 0 : i32
    %c0_i32_1 = arith.constant 0 : i32
    return %c0_i32, %c0_i32_0 : i32, i32
  }
  func.func @transform_14(%arg0: i32) -> (i32, i32) {
    %c0_i32 = arith.constant 0 : i32
    %c0_i32_0 = arith.constant 0 : i32
    %c0_i32_1 = arith.constant 0 : i32
    return %c0_i32, %c0_i32_0 : i32, i32
  }
  func.func @transform_15(%arg0: i32) -> (i32, i32) {
    %c0_i32 = arith.constant 0 : i32
    %c0_i32_0 = arith.constant 0 : i32
    %c0_i32_1 = arith.constant 0 : i32
    return %c0_i32, %c0_i32_0 : i32, i32
  }
  func.func @transform_16(%arg0: i32) -> (i32, i32) {
    %c0_i32 = arith.constant 0 : i32
    %c0_i32_0 = arith.constant 0 : i32
    %c0_i32_1 = arith.constant 0 : i32
    return %c0_i32, %c0_i32_0 : i32, i32
  }
  func.func @transform_17(%arg0: i32) -> (i32, i32) {
    %c0_i32 = arith.constant 0 : i32
    %c0_i32_0 = arith.constant 0 : i32
    return %arg0, %c0_i32 : i32, i32
  }
}

</mosaic_0001>

<llo_original>
// kernel: tpu_custom_call.1
$region0: #{tpu_custom_call.1}
  #allocation0 [shape = 'u32[]', space=smem, size = 0x4, offset = 0x4, fixed_abs, tag = 'smem constant byte address 0x4 - core index']
  #allocation1 [shape = 'u32[144,128]{1,0:T(1,128)}', space=vmem, size = 0x12000, scoped, tag = 'internal scratch']
  #allocation2 [shape = 'f32[1,1]{1,0:T(1,128)S(1)}', space=vmem, size = 0x200, scoped, tag = 'scoped memory for tpu_custom_call.1']
  %s0 = inlined_call_operand.vmem [shape: f32[8,16], index: 0, kind: input, shape index: {}]
  %s1 = inlined_call_operand.vmem [shape: s32[8,3], index: 1, kind: input, shape index: {}]
  %s2 = inlined_call_operand.vmem [shape: bf16[16,128], index: 2, kind: input, shape index: {}]
  %s3 = inlined_call_operand.vmem [shape: f32[1,128], index: 3, kind: input, shape index: {}]
  %s4 = inlined_call_operand.vmem [shape: bf16[128,128], index: 4, kind: input, shape index: {}]
  %s5 = inlined_call_operand.vmem [shape: f32[1,128], index: 5, kind: input, shape index: {}]
  %s6 = inlined_call_operand.vmem [shape: bf16[12,128], index: 6, kind: input, shape index: {}]
  %s7 = inlined_call_operand.vmem [shape: f32[1,128], index: 7, kind: input, shape index: {}]
  %s8 = inlined_call_operand.vmem [shape: bf16[128,128], index: 8, kind: input, shape index: {}]
  %s9 = inlined_call_operand.vmem [shape: f32[1,128], index: 9, kind: input, shape index: {}]
  %s10 = inlined_call_operand.vmem [shape: bf16[128,64], index: 10, kind: input, shape index: {}]
  %s11 = inlined_call_operand.vmem [shape: bf16[128,64], index: 11, kind: input, shape index: {}]
  %s12 = inlined_call_operand.vmem [shape: f32[1,64], index: 12, kind: input, shape index: {}]
  %s13 = inlined_call_operand.vmem [shape: bf16[64,32], index: 13, kind: input, shape index: {}]
  %s14 = inlined_call_operand.vmem [shape: f32[1,32], index: 14, kind: input, shape index: {}]
  %s15 = inlined_call_operand.vmem [shape: f32[1,32], index: 15, kind: input, shape index: {}]
  %s16 = inlined_call_operand.<no memory space> [shape: f32[1,1], index: 16, kind: input, shape index: {}]
  %s17 = inlined_call_operand.vmem [shape: f32[8,1], index: 17, kind: output, shape index: {}]
  %s18 = sld [smem:[#allocation0]]
  $region78: #{tpu_custom_call.1} parent=0
    _
  %s20 = ssub.s32 1, %s18
  %s21 = scalar_select 0, %s20, %s18
  %v22 = vstv %s16
  %23 = vst [vmem:[#allocation2] sm:$0x1] %v22
  // Predicated region
  $region2: #{tpu_custom_call.1} parent=0 // pred_check
    _
  $region3: #{tpu_custom_call.1} parent=0 // pred_check_branch
    %25 = sbr.rel (0) target = $region5
  $region4: #{tpu_custom_call.1} parent=0 // pred_region
    _
  $region5: #{tpu_custom_call.1} parent=0 // pred_fallthru
    _
  // Predicated region
  $region6: #{tpu_custom_call.1} parent=0 // pred_check
    _
  $region7: #{tpu_custom_call.1} parent=0 // pred_check_branch
    %27 = sbr.rel (0) target = $region9
  $region8: #{tpu_custom_call.1} parent=0 // pred_region
    _
  $region9: #{tpu_custom_call.1} parent=0 // pred_fallthru
    _
  // Predicated region
  $region10: #{tpu_custom_call.1} parent=0 // pred_check
    _
  $region11: #{tpu_custom_call.1} parent=0 // pred_check_branch
    %29 = sbr.rel (0) target = $region13
  $region12: #{tpu_custom_call.1} parent=0 // pred_region
    _
  $region13: #{tpu_custom_call.1} parent=0 // pred_fallthru
    _
  // Predicated region
  $region14: #{tpu_custom_call.1} parent=0 // pred_check
    _
  $region15: #{tpu_custom_call.1} parent=0 // pred_check_branch
    %31 = sbr.rel (0) target = $region17
  $region16: #{tpu_custom_call.1} parent=0 // pred_region
    _
  $region17: #{tpu_custom_call.1} parent=0 // pred_fallthru
    _
  // Predicated region
  $region18: #{tpu_custom_call.1} parent=0 // pred_check
    _
  $region19: #{tpu_custom_call.1} parent=0 // pred_check_branch
    %33 = sbr.rel (0) target = $region21
  $region20: #{tpu_custom_call.1} parent=0 // pred_region
    _
  $region21: #{tpu_custom_call.1} parent=0 // pred_fallthru
    _
  // Predicated region
  $region22: #{tpu_custom_call.1} parent=0 // pred_check
    _
  $region23: #{tpu_custom_call.1} parent=0 // pred_check_branch
    %35 = sbr.rel (0) target = $region25
  $region24: #{tpu_custom_call.1} parent=0 // pred_region
    _
  $region25: #{tpu_custom_call.1} parent=0 // pred_fallthru
    _
  // Predicated region
  $region26: #{tpu_custom_call.1} parent=0 // pred_check
    _
  $region27: #{tpu_custom_call.1} parent=0 // pred_check_branch
    %37 = sbr.rel (0) target = $region29
  $region28: #{tpu_custom_call.1} parent=0 // pred_region
    _
  $region29: #{tpu_custom_call.1} parent=0 // pred_fallthru
    _
  // Predicated region
  $region30: #{tpu_custom_call.1} parent=0 // pred_check
    _
  $region31: #{tpu_custom_call.1} parent=0 // pred_check_branch
    %39 = sbr.rel (0) target = $region33
  $region32: #{tpu_custom_call.1} parent=0 // pred_region
    _
  $region33: #{tpu_custom_call.1} parent=0 // pred_fallthru
    _
  // Predicated region
  $region34: #{tpu_custom_call.1} parent=0 // pred_check
    _
  $region35: #{tpu_custom_call.1} parent=0 // pred_check_branch
    %41 = sbr.rel (0) target = $region37
  $region36: #{tpu_custom_call.1} parent=0 // pred_region
    _
  $region37: #{tpu_custom_call.1} parent=0 // pred_fallthru
    _
  // Predicated region
  $region38: #{tpu_custom_call.1} parent=0 // pred_check
    _
  $region39: #{tpu_custom_call.1} parent=0 // pred_check_branch
    %43 = sbr.rel (0) target = $region41
  $region40: #{tpu_custom_call.1} parent=0 // pred_region
    _
  $region41: #{tpu_custom_call.1} parent=0 // pred_fallthru
    _
  // Predicated region
  $region42: #{tpu_custom_call.1} parent=0 // pred_check
    _
  $region43: #{tpu_custom_call.1} parent=0 // pred_check_branch
    %45 = sbr.rel (0) target = $region45
  $region44: #{tpu_custom_call.1} parent=0 // pred_region
    _
  $region45: #{tpu_custom_call.1} parent=0 // pred_fallthru
    _
  // Predicated region
  $region46: #{tpu_custom_call.1} parent=0 // pred_check
    _
  $region47: #{tpu_custom_call.1} parent=0 // pred_check_branch
    %47 = sbr.rel (0) target = $region49
  $region48: #{tpu_custom_call.1} parent=0 // pred_region
    _
  $region49: #{tpu_custom_call.1} parent=0 // pred_fallthru
    _
  // Predicated region
  $region50: #{tpu_custom_call.1} parent=0 // pred_check
    _
  $region51: #{tpu_custom_call.1} parent=0 // pred_check_branch
    %49 = sbr.rel (0) target = $region53
  $region52: #{tpu_custom_call.1} parent=0 // pred_region
    _
  $region53: #{tpu_custom_call.1} parent=0 // pred_fallthru
    _
  // Predicated region
  $region54: #{tpu_custom_call.1} parent=0 // pred_check
    _
  $region55: #{tpu_custom_call.1} parent=0 // pred_check_branch
    %51 = sbr.rel (0) target = $region57
  $region56: #{tpu_custom_call.1} parent=0 // pred_region
    _
  $region57: #{tpu_custom_call.1} parent=0 // pred_fallthru
    _
  // Predicated region
  $region58: #{tpu_custom_call.1} parent=0 // pred_check
    _
  $region59: #{tpu_custom_call.1} parent=0 // pred_check_branch
    %53 = sbr.rel (0) target = $region61
  $region60: #{tpu_custom_call.1} parent=0 // pred_region
    _
  $region61: #{tpu_custom_call.1} parent=0 // pred_fallthru
    _
  // Predicated region
  $region62: #{tpu_custom_call.1} parent=0 // pred_check
    _
  $region63: #{tpu_custom_call.1} parent=0 // pred_check_branch
    %55 = sbr.rel (0) target = $region65
  $region64: #{tpu_custom_call.1} parent=0 // pred_region
    _
  $region65: #{tpu_custom_call.1} parent=0 // pred_fallthru
    _
  // Predicated region
  $region66: #{tpu_custom_call.1} parent=0 // pred_check
    _
  $region67: #{tpu_custom_call.1} parent=0 // pred_check_branch
    %57 = sbr.rel (0) target = $region69
  $region68: #{tpu_custom_call.1} parent=0 // pred_region
    _
  $region69: #{tpu_custom_call.1} parent=0 // pred_fallthru
    _
  %v59 = vld [vmem:[%s1] sm:$0xff]
  %v60 = vlaneseq
  %v61 = vand.u32 %v60, 127
  %62 = vset.pattern.permute.xlu0 0
  %63 = vperm.xlu0 %62, %v59
  %v64 = vpop.permute.xlu0 %63
  %vm65 = vcmp.eq.s32.totalorder %v61, %v64
  %v66 = vsel %vm65, 1, 0
  %v67 = vcvt.s32.f32 %v66
  %v68 = vpack.c.bf16 %v67, %v67
  %v69 = vadd.bf16 %v68, 0
  %v70 = vadd.s32 %v59, 3
  %71 = vset.pattern.permute.xlu0 1
  %72 = vperm.xlu0 %71, %v70
  %v73 = vpop.permute.xlu0 %72
  %vm74 = vcmp.eq.s32.totalorder %v61, %v73
  %v75 = vsel %vm74, 1, 0
  %v76 = vcvt.s32.f32 %v75
  %v77 = vpack.c.bf16 %v76, %v76
  %v78 = vadd.bf16 %v69, %v77
  %v79 = vadd.s32 %v59, 7
  %80 = vset.pattern.permute.xlu0 2
  %81 = vperm.xlu0 %80, %v79
  %v82 = vpop.permute.xlu0 %81
  %vm83 = vcmp.eq.s32.totalorder %v61, %v82
  %v84 = vsel %vm83, 1, 0
  %v85 = vcvt.s32.f32 %v84
  %v86 = vpack.c.bf16 %v85, %v85
  %v87 = vadd.bf16 %v78, %v86
  %v88 = vld [vmem:[%s0] sm:$0xff]
  %v89 = vpack.c.bf16 %v88, %v88
  %v90 = vld [vmem:[%s2] sm:$0xf]
  %v91 = vld [vmem:[%s2 + $0x4] sm:$0xf]
  %v92 = vld [vmem:[%s3] sm:$0x1]
  %v94 = vlaneseq
  %v95 = vshrl.u32 %v94, 7
  %v96 = vsub.s32 0, %v95
  %v97 = vrot.slane %v92, %v96
  %v101 = vunpack.c.l.b16 %v90
  %v102 = vunpack.c.l.b16 %v91
  %v103 = vpack.c.b16 %v102, %v101
  %vm105 = vcmask 130048
  %v107 = vsel %vm105, %v89, 0
  %109 = vmatprep.subr.bf16.mxu0 0
  %110 = vmatpush1.bf16.msra.mxu0 %v103
  %111 = vmatprep.subr.bf16.mxu0 0
  %112 = vmatpush1.bf16.msra.mxu0 0
  %113 = vmatprep.subr.bf16.mxu0 0
  %114 = vmatpush1.bf16.msra.mxu0 0
  %115 = vmatprep.subr.bf16.mxu0 0
  %116 = vmatpush1.bf16.msra.mxu0 0
  %117 = vmatprep.subr.bf16.mxu0 0
  %118 = vmatpush1.bf16.msra.mxu0 0
  %119 = vmatprep.subr.bf16.mxu0 0
  %120 = vmatpush1.bf16.msra.mxu0 0
  %121 = vmatprep.subr.bf16.mxu0 0
  %122 = vmatpush1.bf16.msra.mxu0 0
  %123 = vmatprep.subr.bf16.mxu0 0
  %124 = vmatpush1.bf16.msra.mxu0 0
  %125 = vmatprep.subr.bf16.mxu0 0
  %126 = vmatpush1.bf16.msra.mxu0 0
  %127 = vmatprep.subr.bf16.mxu0 0
  %128 = vmatpush1.bf16.msra.mxu0 0
  %129 = vmatprep.subr.bf16.mxu0 0
  %130 = vmatpush1.bf16.msra.mxu0 0
  %131 = vmatprep.subr.bf16.mxu0 0
  %132 = vmatpush1.bf16.msra.mxu0 0
  %133 = vmatprep.subr.bf16.mxu0 0
  %134 = vmatpush1.bf16.msra.mxu0 0
  %135 = vmatprep.subr.bf16.mxu0 0
  %136 = vmatpush1.bf16.msra.mxu0 0
  %137 = vmatprep.subr.bf16.mxu0 0
  %138 = vmatpush1.bf16.msra.mxu0 0
  %139 = vmatprep.subr.bf16.mxu0 0
  %140 = vmatpush1.bf16.msra.mxu0 0
  %141 = vmatprep.mubr.bf16.mxu0 0
  %142 = vmatmul.mubr.bf16.gmra.mrb[0].mxu0 %v107
  %v143 = vpop.f32.mrb[0].mxu0
  %v144 = vadd.f32 %v97, %v143
  %v145 = vpop.f32.mrb[0].mxu0
  %v146 = vpop.f32.mrb[0].mxu0
  %v147 = vpop.f32.mrb[0].mxu0
  %148 = vdwg.mxu0
  %v149 = vmax.f32 %v144, 0.0
  %v150 = vpack.c.bf16 %v149, %v149
  %v151 = vld [vmem:[%s4] sm:$0xf]
  %v152 = vld [vmem:[%s4 + $0x4] sm:$0xf]
  %v153 = vld [vmem:[%s4 + $0x8] sm:$0xf]
  %v154 = vld [vmem:[%s4 + $0xc] sm:$0xf]
  %v155 = vld [vmem:[%s4 + $0x10] sm:$0xf]
  %v156 = vld [vmem:[%s4 + $0x14] sm:$0xf]
  %v157 = vld [vmem:[%s4 + $0x18] sm:$0xf]
  %v158 = vld [vmem:[%s4 + $0x1c] sm:$0xf]
  %v159 = vld [vmem:[%s4 + $0x20] sm:$0xf]
  %v160 = vld [vmem:[%s4 + $0x24] sm:$0xf]
  %v161 = vld [vmem:[%s4 + $0x28] sm:$0xf]
  %v162 = vld [vmem:[%s4 + $0x2c] sm:$0xf]
  %v163 = vld [vmem:[%s4 + $0x30] sm:$0xf]
  %v164 = vld [vmem:[%s4 + $0x34] sm:$0xf]
  %v165 = vld [vmem:[%s4 + $0x38] sm:$0xf]
  %v166 = vld [vmem:[%s4 + $0x3c] sm:$0xf]
  %v167 = vld [vmem:[%s5] sm:$0x1]
  %v169 = vlaneseq
  %v170 = vshrl.u32 %v169, 7
  %v171 = vsub.s32 0, %v170
  %v172 = vrot.slane %v167, %v171
  %v190 = vunpack.c.l.b16 %v151
  %v191 = vunpack.c.l.b16 %v152
  %v192 = vunpack.c.l.b16 %v153
  %v193 = vunpack.c.l.b16 %v154
  %v194 = vunpack.c.l.b16 %v155
  %v195 = vunpack.c.l.b16 %v156
  %v196 = vunpack.c.l.b16 %v157
  %v197 = vunpack.c.l.b16 %v158
  %v198 = vunpack.c.l.b16 %v159
  %v199 = vunpack.c.l.b16 %v160
  %v200 = vunpack.c.l.b16 %v161
  %v201 = vunpack.c.l.b16 %v162
  %v202 = vunpack.c.l.b16 %v163
  %v203 = vunpack.c.l.b16 %v164
  %v204 = vunpack.c.l.b16 %v165
  %v205 = vunpack.c.l.b16 %v166
  %v206 = vpack.c.b16 %v191, %v190
  %v207 = vpack.c.b16 %v193, %v192
  %v208 = vpack.c.b16 %v195, %v194
  %v209 = vpack.c.b16 %v197, %v196
  %v210 = vpack.c.b16 %v199, %v198
  %v211 = vpack.c.b16 %v201, %v200
  %v212 = vpack.c.b16 %v203, %v202
  %v213 = vpack.c.b16 %v205, %v204
  %222 = vmatprep.subr.bf16.mxu0 0
  %223 = vmatpush1.bf16.msra.mxu0 %v206
  %224 = vmatprep.subr.bf16.mxu0 0
  %225 = vmatpush1.bf16.msra.mxu0 %v207
  %226 = vmatprep.subr.bf16.mxu0 0
  %227 = vmatpush1.bf16.msra.mxu0 %v208
  %228 = vmatprep.subr.bf16.mxu0 0
  %229 = vmatpush1.bf16.msra.mxu0 %v209
  %230 = vmatprep.subr.bf16.mxu0 0
  %231 = vmatpush1.bf16.msra.mxu0 %v210
  %232 = vmatprep.subr.bf16.mxu0 0
  %233 = vmatpush1.bf16.msra.mxu0 %v211
  %234 = vmatprep.subr.bf16.mxu0 0
  %235 = vmatpush1.bf16.msra.mxu0 %v212
  %236 = vmatprep.subr.bf16.mxu0 0
  %237 = vmatpush1.bf16.msra.mxu0 %v213
  %238 = vmatprep.subr.bf16.mxu0 0
  %239 = vmatpush1.bf16.msra.mxu0 0
  %240 = vmatprep.subr.bf16.mxu0 0
  %241 = vmatpush1.bf16.msra.mxu0 0
  %242 = vmatprep.subr.bf16.mxu0 0
  %243 = vmatpush1.bf16.msra.mxu0 0
  %244 = vmatprep.subr.bf16.mxu0 0
  %245 = vmatpush1.bf16.msra.mxu0 0
  %246 = vmatprep.subr.bf16.mxu0 0
  %247 = vmatpush1.bf16.msra.mxu0 0
  %248 = vmatprep.subr.bf16.mxu0 0
  %249 = vmatpush1.bf16.msra.mxu0 0
  %250 = vmatprep.subr.bf16.mxu0 0
  %251 = vmatpush1.bf16.msra.mxu0 0
  %252 = vmatprep.subr.bf16.mxu0 0
  %253 = vmatpush1.bf16.msra.mxu0 0
  %254 = vmatprep.mubr.bf16.mxu0 0
  %255 = vmatmul.mubr.bf16.gmra.mrb[0].mxu0 %v150
  %v256 = vpop.f32.mrb[0].mxu0
  %v257 = vadd.f32 %v172, %v256
  %v258 = vpop.f32.mrb[0].mxu0
  %v259 = vpop.f32.mrb[0].mxu0
  %v260 = vpop.f32.mrb[0].mxu0
  %261 = vdwg.mxu0
  %v262 = vmax.f32 %v257, 0.0
  %v263 = vld [vmem:[%s6] sm:$0xf]
  %v264 = vld [vmem:[%s6 + $0x4] sm:$0x3]
  %v265 = vld [vmem:[%s7] sm:$0x1]
  %v267 = vlaneseq
  %v268 = vshrl.u32 %v267, 7
  %v269 = vsub.s32 0, %v268
  %v270 = vrot.slane %v265, %v269
  %v274 = vunpack.c.l.b16 %v263
  %v275 = vunpack.c.l.b16 %v264
  %v276 = vpack.c.b16 %v275, %v274
  %vm277 = vcmask 97280
  %v279 = vsel %vm277, %v87, 0
  %vm281 = vcmask 1045504
  %v283 = vsel %vm281, %v276, 0
  %285 = vmatprep.subr.bf16.mxu0 0
  %286 = vmatpush1.bf16.msra.mxu0 %v283
  %287 = vmatprep.subr.bf16.mxu0 0
  %288 = vmatpush1.bf16.msra.mxu0 0
  %289 = vmatprep.subr.bf16.mxu0 0
  %290 = vmatpush1.bf16.msra.mxu0 0
  %291 = vmatprep.subr.bf16.mxu0 0
  %292 = vmatpush1.bf16.msra.mxu0 0
  %293 = vmatprep.subr.bf16.mxu0 0
  %294 = vmatpush1.bf16.msra.mxu0 0
  %295 = vmatprep.subr.bf16.mxu0 0
  %296 = vmatpush1.bf16.msra.mxu0 0
  %297 = vmatprep.subr.bf16.mxu0 0
  %298 = vmatpush1.bf16.msra.mxu0 0
  %299 = vmatprep.subr.bf16.mxu0 0
  %300 = vmatpush1.bf16.msra.mxu0 0
  %301 = vmatprep.subr.bf16.mxu0 0
  %302 = vmatpush1.bf16.msra.mxu0 0
  %303 = vmatprep.subr.bf16.mxu0 0
  %304 = vmatpush1.bf16.msra.mxu0 0
  %305 = vmatprep.subr.bf16.mxu0 0
  %306 = vmatpush1.bf16.msra.mxu0 0
  %307 = vmatprep.subr.bf16.mxu0 0
  %308 = vmatpush1.bf16.msra.mxu0 0
  %309 = vmatprep.subr.bf16.mxu0 0
  %310 = vmatpush1.bf16.msra.mxu0 0
  %311 = vmatprep.subr.bf16.mxu0 0
  %312 = vmatpush1.bf16.msra.mxu0 0
  %313 = vmatprep.subr.bf16.mxu0 0
  %314 = vmatpush1.bf16.msra.mxu0 0
  %315 = vmatprep.subr.bf16.mxu0 0
  %316 = vmatpush1.bf16.msra.mxu0 0
  %317 = vmatprep.mubr.bf16.mxu0 0
  %318 = vmatmul.mubr.bf16.gmra.mrb[0].mxu0 %v279
  %v319 = vpop.f32.mrb[0].mxu0
  %v320 = vadd.f32 %v270, %v319
  %v321 = vpop.f32.mrb[0].mxu0
  %v322 = vpop.f32.mrb[0].mxu0
  %v323 = vpop.f32.mrb[0].mxu0
  %324 = vdwg.mxu0
  %v325 = vmax.f32 %v320, 0.0
  %v326 = vpack.c.bf16 %v325, %v325
  %v327 = vld [vmem:[%s8] sm:$0xf]
  %v328 = vld [vmem:[%s8 + $0x4] sm:$0xf]
  %v329 = vld [vmem:[%s8 + $0x8] sm:$0xf]
  %v330 = vld [vmem:[%s8 + $0xc] sm:$0xf]
  %v331 = vld [vmem:[%s8 + $0x10] sm:$0xf]
  %v332 = vld [vmem:[%s8 + $0x14] sm:$0xf]
  %v333 = vld [vmem:[%s8 + $0x18] sm:$0xf]
  %v334 = vld [vmem:[%s8 + $0x1c] sm:$0xf]
  %v335 = vld [vmem:[%s8 + $0x20] sm:$0xf]
  %v336 = vld [vmem:[%s8 + $0x24] sm:$0xf]
  %v337 = vld [vmem:[%s8 + $0x28] sm:$0xf]
  %v338 = vld [vmem:[%s8 + $0x2c] sm:$0xf]
  %v339 = vld [vmem:[%s8 + $0x30] sm:$0xf]
  %v340 = vld [vmem:[%s8 + $0x34] sm:$0xf]
  %v341 = vld [vmem:[%s8 + $0x38] sm:$0xf]
  %v342 = vld [vmem:[%s8 + $0x3c] sm:$0xf]
  %v343 = vld [vmem:[%s9] sm:$0x1]
  %v345 = vlaneseq
  %v346 = vshrl.u32 %v345, 7
  %v347 = vsub.s32 0, %v346
  %v348 = vrot.slane %v343, %v347
  %v366 = vunpack.c.l.b16 %v327
  %v367 = vunpack.c.l.b16 %v328
  %v368 = vunpack.c.l.b16 %v329
  %v369 = vunpack.c.l.b16 %v330
  %v370 = vunpack.c.l.b16 %v331
  %v371 = vunpack.c.l.b16 %v332
  %v372 = vunpack.c.l.b16 %v333
  %v373 = vunpack.c.l.b16 %v334
  %v374 = vunpack.c.l.b16 %v335
  %v375 = vunpack.c.l.b16 %v336
  %v376 = vunpack.c.l.b16 %v337
  %v377 = vunpack.c.l.b16 %v338
  %v378 = vunpack.c.l.b16 %v339
  %v379 = vunpack.c.l.b16 %v340
  %v380 = vunpack.c.l.b16 %v341
  %v381 = vunpack.c.l.b16 %v342
  %v382 = vpack.c.b16 %v367, %v366
  %v383 = vpack.c.b16 %v369, %v368
  %v384 = vpack.c.b16 %v371, %v370
  %v385 = vpack.c.b16 %v373, %v372
  %v386 = vpack.c.b16 %v375, %v374
  %v387 = vpack.c.b16 %v377, %v376
  %v388 = vpack.c.b16 %v379, %v378
  %v389 = vpack.c.b16 %v381, %v380
  %398 = vmatprep.subr.bf16.mxu0 0
  %399 = vmatpush1.bf16.msra.mxu0 %v382
  %400 = vmatprep.subr.bf16.mxu0 0
  %401 = vmatpush1.bf16.msra.mxu0 %v383
  %402 = vmatprep.subr.bf16.mxu0 0
  %403 = vmatpush1.bf16.msra.mxu0 %v384
  %404 = vmatprep.subr.bf16.mxu0 0
  %405 = vmatpush1.bf16.msra.mxu0 %v385
  %406 = vmatprep.subr.bf16.mxu0 0
  %407 = vmatpush1.bf16.msra.mxu0 %v386
  %408 = vmatprep.subr.bf16.mxu0 0
  %409 = vmatpush1.bf16.msra.mxu0 %v387
  %410 = vmatprep.subr.bf16.mxu0 0
  %411 = vmatpush1.bf16.msra.mxu0 %v388
  %412 = vmatprep.subr.bf16.mxu0 0
  %413 = vmatpush1.bf16.msra.mxu0 %v389
  %414 = vmatprep.subr.bf16.mxu0 0
  %415 = vmatpush1.bf16.msra.mxu0 0
  %416 = vmatprep.subr.bf16.mxu0 0
  %417 = vmatpush1.bf16.msra.mxu0 0
  %418 = vmatprep.subr.bf16.mxu0 0
  %419 = vmatpush1.bf16.msra.mxu0 0
  %420 = vmatprep.subr.bf16.mxu0 0
  %421 = vmatpush1.bf16.msra.mxu0 0
  %422 = vmatprep.subr.bf16.mxu0 0
  %423 = vmatpush1.bf16.msra.mxu0 0
  %424 = vmatprep.subr.bf16.mxu0 0
  %425 = vmatpush1.bf16.msra.mxu0 0
  %426 = vmatprep.subr.bf16.mxu0 0
  %427 = vmatpush1.bf16.msra.mxu0 0
  %428 = vmatprep.subr.bf16.mxu0 0
  %429 = vmatpush1.bf16.msra.mxu0 0
  %430 = vmatprep.mubr.bf16.mxu0 0
  %431 = vmatmul.mubr.bf16.gmra.mrb[0].mxu0 %v326
  %v432 = vpop.f32.mrb[0].mxu0
  %v433 = vadd.f32 %v348, %v432
  %v434 = vpop.f32.mrb[0].mxu0
  %v435 = vpop.f32.mrb[0].mxu0
  %v436 = vpop.f32.mrb[0].mxu0
  %437 = vdwg.mxu0
  %v438 = vmax.f32 %v433, 0.0
  %v439 = vpack.c.bf16 %v262, %v262
  %v440 = vld [vmem:[%s10] sm:$0xf]
  %v441 = vld [vmem:[%s10 + $0x4] sm:$0xf]
  %v442 = vld [vmem:[%s10 + $0x8] sm:$0xf]
  %v443 = vld [vmem:[%s10 + $0xc] sm:$0xf]
  %v444 = vld [vmem:[%s10 + $0x10] sm:$0xf]
  %v445 = vld [vmem:[%s10 + $0x14] sm:$0xf]
  %v446 = vld [vmem:[%s10 + $0x18] sm:$0xf]
  %v447 = vld [vmem:[%s10 + $0x1c] sm:$0xf]
  %v448 = vld [vmem:[%s10 + $0x20] sm:$0xf]
  %v449 = vld [vmem:[%s10 + $0x24] sm:$0xf]
  %v450 = vld [vmem:[%s10 + $0x28] sm:$0xf]
  %v451 = vld [vmem:[%s10 + $0x2c] sm:$0xf]
  %v452 = vld [vmem:[%s10 + $0x30] sm:$0xf]
  %v453 = vld [vmem:[%s10 + $0x34] sm:$0xf]
  %v454 = vld [vmem:[%s10 + $0x38] sm:$0xf]
  %v455 = vld [vmem:[%s10 + $0x3c] sm:$0xf]
  %v456 = vpack.c.bf16 %v438, %v438
  %v457 = vld [vmem:[%s11] sm:$0xf]
  %v458 = vld [vmem:[%s11 + $0x4] sm:$0xf]
  %v459 = vld [vmem:[%s11 + $0x8] sm:$0xf]
  %v460 = vld [vmem:[%s11 + $0xc] sm:$0xf]
  %v461 = vld [vmem:[%s11 + $0x10] sm:$0xf]
  %v462 = vld [vmem:[%s11 + $0x14] sm:$0xf]
  %v463 = vld [vmem:[%s11 + $0x18] sm:$0xf]
  %v464 = vld [vmem:[%s11 + $0x1c] sm:$0xf]
  %v465 = vld [vmem:[%s11 + $0x20] sm:$0xf]
  %v466 = vld [vmem:[%s11 + $0x24] sm:$0xf]
  %v467 = vld [vmem:[%s11 + $0x28] sm:$0xf]
  %v468 = vld [vmem:[%s11 + $0x2c] sm:$0xf]
  %v469 = vld [vmem:[%s11 + $0x30] sm:$0xf]
  %v470 = vld [vmem:[%s11 + $0x34] sm:$0xf]
  %v471 = vld [vmem:[%s11 + $0x38] sm:$0xf]
  %v472 = vld [vmem:[%s11 + $0x3c] sm:$0xf]
  %v489 = vunpack.c.l.b16 %v457
  %v490 = vunpack.c.l.b16 %v458
  %v491 = vunpack.c.l.b16 %v459
  %v492 = vunpack.c.l.b16 %v460
  %v493 = vunpack.c.l.b16 %v461
  %v494 = vunpack.c.l.b16 %v462
  %v495 = vunpack.c.l.b16 %v463
  %v496 = vunpack.c.l.b16 %v464
  %v497 = vunpack.c.l.b16 %v465
  %v498 = vunpack.c.l.b16 %v466
  %v499 = vunpack.c.l.b16 %v467
  %v500 = vunpack.c.l.b16 %v468
  %v501 = vunpack.c.l.b16 %v469
  %v502 = vunpack.c.l.b16 %v470
  %v503 = vunpack.c.l.b16 %v471
  %v504 = vunpack.c.l.b16 %v472
  %v505 = vpack.c.b16 %v490, %v489
  %v506 = vpack.c.b16 %v492, %v491
  %v507 = vpack.c.b16 %v494, %v493
  %v508 = vpack.c.b16 %v496, %v495
  %v509 = vpack.c.b16 %v498, %v497
  %v510 = vpack.c.b16 %v500, %v499
  %v511 = vpack.c.b16 %v502, %v501
  %v512 = vpack.c.b16 %v504, %v503
  %521 = vmatprep.subr.bf16.mxu0 0
  %522 = vmatpush1.bf16.msra.mxu0 %v505
  %523 = vmatprep.subr.bf16.mxu0 0
  %524 = vmatpush1.bf16.msra.mxu0 %v506
  %525 = vmatprep.subr.bf16.mxu0 0
  %526 = vmatpush1.bf16.msra.mxu0 %v507
  %527 = vmatprep.subr.bf16.mxu0 0
  %528 = vmatpush1.bf16.msra.mxu0 %v508
  %529 = vmatprep.subr.bf16.mxu0 0
  %530 = vmatpush1.bf16.msra.mxu0 %v509
  %531 = vmatprep.subr.bf16.mxu0 0
  %532 = vmatpush1.bf16.msra.mxu0 %v510
  %533 = vmatprep.subr.bf16.mxu0 0
  %534 = vmatpush1.bf16.msra.mxu0 %v511
  %535 = vmatprep.subr.bf16.mxu0 0
  %536 = vmatpush1.bf16.msra.mxu0 %v512
  %537 = vmatprep.subr.bf16.mxu0 0
  %538 = vmatpush1.bf16.msra.mxu0 0
  %539 = vmatprep.subr.bf16.mxu0 0
  %540 = vmatpush1.bf16.msra.mxu0 0
  %541 = vmatprep.subr.bf16.mxu0 0
  %542 = vmatpush1.bf16.msra.mxu0 0
  %543 = vmatprep.subr.bf16.mxu0 0
  %544 = vmatpush1.bf16.msra.mxu0 0
  %545 = vmatprep.subr.bf16.mxu0 0
  %546 = vmatpush1.bf16.msra.mxu0 0
  %547 = vmatprep.subr.bf16.mxu0 0
  %548 = vmatpush1.bf16.msra.mxu0 0
  %549 = vmatprep.subr.bf16.mxu0 0
  %550 = vmatpush1.bf16.msra.mxu0 0
  %551 = vmatprep.subr.bf16.mxu0 0
  %552 = vmatpush1.bf16.msra.mxu0 0
  %553 = vmatprep.mubr.bf16.mxu0 0
  %554 = vmatmul.mubr.bf16.gmra.mrb[0].mxu0 %v456
  %v555 = vpop.f32.mrb[0].mxu0
  %v556 = vadd.f32 0.0, %v555
  %v557 = vpop.f32.mrb[0].mxu0
  %v558 = vpop.f32.mrb[0].mxu0
  %v559 = vpop.f32.mrb[0].mxu0
  %560 = vdwg.mxu0
  %v577 = vunpack.c.l.b16 %v440
  %v578 = vunpack.c.l.b16 %v441
  %v579 = vunpack.c.l.b16 %v442
  %v580 = vunpack.c.l.b16 %v443
  %v581 = vunpack.c.l.b16 %v444
  %v582 = vunpack.c.l.b16 %v445
  %v583 = vunpack.c.l.b16 %v446
  %v584 = vunpack.c.l.b16 %v447
  %v585 = vunpack.c.l.b16 %v448
  %v586 = vunpack.c.l.b16 %v449
  %v587 = vunpack.c.l.b16 %v450
  %v588 = vunpack.c.l.b16 %v451
  %v589 = vunpack.c.l.b16 %v452
  %v590 = vunpack.c.l.b16 %v453
  %v591 = vunpack.c.l.b16 %v454
  %v592 = vunpack.c.l.b16 %v455
  %v593 = vpack.c.b16 %v578, %v577
  %v594 = vpack.c.b16 %v580, %v579
  %v595 = vpack.c.b16 %v582, %v581
  %v596 = vpack.c.b16 %v584, %v583
  %v597 = vpack.c.b16 %v586, %v585
  %v598 = vpack.c.b16 %v588, %v587
  %v599 = vpack.c.b16 %v590, %v589
  %v600 = vpack.c.b16 %v592, %v591
  %609 = vmatprep.subr.bf16.mxu0 0
  %610 = vmatpush1.bf16.msra.mxu0 %v593
  %611 = vmatprep.subr.bf16.mxu0 0
  %612 = vmatpush1.bf16.msra.mxu0 %v594
  %613 = vmatprep.subr.bf16.mxu0 0
  %614 = vmatpush1.bf16.msra.mxu0 %v595
  %615 = vmatprep.subr.bf16.mxu0 0
  %616 = vmatpush1.bf16.msra.mxu0 %v596
  %617 = vmatprep.subr.bf16.mxu0 0
  %618 = vmatpush1.bf16.msra.mxu0 %v597
  %619 = vmatprep.subr.bf16.mxu0 0
  %620 = vmatpush1.bf16.msra.mxu0 %v598
  %621 = vmatprep.subr.bf16.mxu0 0
  %622 = vmatpush1.bf16.msra.mxu0 %v599
  %623 = vmatprep.subr.bf16.mxu0 0
  %624 = vmatpush1.bf16.msra.mxu0 %v600
  %625 = vmatprep.subr.bf16.mxu0 0
  %626 = vmatpush1.bf16.msra.mxu0 0
  %627 = vmatprep.subr.bf16.mxu0 0
  %628 = vmatpush1.bf16.msra.mxu0 0
  %629 = vmatprep.subr.bf16.mxu0 0
  %630 = vmatpush1.bf16.msra.mxu0 0
  %631 = vmatprep.subr.bf16.mxu0 0
  %632 = vmatpush1.bf16.msra.mxu0 0
  %633 = vmatprep.subr.bf16.mxu0 0
  %634 = vmatpush1.bf16.msra.mxu0 0
  %635 = vmatprep.subr.bf16.mxu0 0
  %636 = vmatpush1.bf16.msra.mxu0 0
  %637 = vmatprep.subr.bf16.mxu0 0
  %638 = vmatpush1.bf16.msra.mxu0 0
  %639 = vmatprep.subr.bf16.mxu0 0
  %640 = vmatpush1.bf16.msra.mxu0 0
  %641 = vmatprep.mubr.bf16.mxu0 0
  %642 = vmatmul.mubr.bf16.gmra.mrb[0].mxu0 %v439
  %v643 = vpop.f32.mrb[0].mxu0
  %v644 = vadd.f32 %v556, %v643
  %v645 = vpop.f32.mrb[0].mxu0
  %v646 = vpop.f32.mrb[0].mxu0
  %v647 = vpop.f32.mrb[0].mxu0
  %648 = vdwg.mxu0
  %v649 = vld [vmem:[%s12] sm:$0x1]
  %v651 = vlaneseq
  %v652 = vshrl.u32 %v651, 7
  %v653 = vsub.s32 0, %v652
  %v654 = vrot.slane %v649, %v653
  %v656 = vadd.f32 %v644, %v654
  %v657 = vmax.f32 %v656, 0.0
  %v658 = vpack.c.bf16 %v657, %v657
  %v659 = vld [vmem:[%s13] sm:$0xf]
  %v660 = vld [vmem:[%s13 + $0x4] sm:$0xf]
  %v661 = vld [vmem:[%s13 + $0x8] sm:$0xf]
  %v662 = vld [vmem:[%s13 + $0xc] sm:$0xf]
  %v663 = vld [vmem:[%s13 + $0x10] sm:$0xf]
  %v664 = vld [vmem:[%s13 + $0x14] sm:$0xf]
  %v665 = vld [vmem:[%s13 + $0x18] sm:$0xf]
  %v666 = vld [vmem:[%s13 + $0x1c] sm:$0xf]
  %v667 = vld [vmem:[%s14] sm:$0x1]
  %v669 = vlaneseq
  %v670 = vshrl.u32 %v669, 7
  %v671 = vsub.s32 0, %v670
  %v672 = vrot.slane %v667, %v671
  %v682 = vunpack.c.l.b16 %v659
  %v683 = vunpack.c.l.b16 %v660
  %v684 = vunpack.c.l.b16 %v661
  %v685 = vunpack.c.l.b16 %v662
  %v686 = vunpack.c.l.b16 %v663
  %v687 = vunpack.c.l.b16 %v664
  %v688 = vunpack.c.l.b16 %v665
  %v689 = vunpack.c.l.b16 %v666
  %v690 = vpack.c.b16 %v683, %v682
  %v691 = vpack.c.b16 %v685, %v684
  %v692 = vpack.c.b16 %v687, %v686
  %v693 = vpack.c.b16 %v689, %v688
  %vm698 = vcmask 523264
  %v700 = vsel %vm698, %v658, 0
  %702 = vmatprep.subr.bf16.mxu0 0
  %703 = vmatpush1.bf16.msra.mxu0 %v690
  %704 = vmatprep.subr.bf16.mxu0 0
  %705 = vmatpush1.bf16.msra.mxu0 %v691
  %706 = vmatprep.subr.bf16.mxu0 0
  %707 = vmatpush1.bf16.msra.mxu0 %v692
  %708 = vmatprep.subr.bf16.mxu0 0
  %709 = vmatpush1.bf16.msra.mxu0 %v693
  %710 = vmatprep.subr.bf16.mxu0 0
  %711 = vmatpush1.bf16.msra.mxu0 0
  %712 = vmatprep.subr.bf16.mxu0 0
  %713 = vmatpush1.bf16.msra.mxu0 0
  %714 = vmatprep.subr.bf16.mxu0 0
  %715 = vmatpush1.bf16.msra.mxu0 0
  %716 = vmatprep.subr.bf16.mxu0 0
  %717 = vmatpush1.bf16.msra.mxu0 0
  %718 = vmatprep.subr.bf16.mxu0 0
  %719 = vmatpush1.bf16.msra.mxu0 0
  %720 = vmatprep.subr.bf16.mxu0 0
  %721 = vmatpush1.bf16.msra.mxu0 0
  %722 = vmatprep.subr.bf16.mxu0 0
  %723 = vmatpush1.bf16.msra.mxu0 0
  %724 = vmatprep.subr.bf16.mxu0 0
  %725 = vmatpush1.bf16.msra.mxu0 0
  %726 = vmatprep.subr.bf16.mxu0 0
  %727 = vmatpush1.bf16.msra.mxu0 0
  %728 = vmatprep.subr.bf16.mxu0 0
  %729 = vmatpush1.bf16.msra.mxu0 0
  %730 = vmatprep.subr.bf16.mxu0 0
  %731 = vmatpush1.bf16.msra.mxu0 0
  %732 = vmatprep.subr.bf16.mxu0 0
  %733 = vmatpush1.bf16.msra.mxu0 0
  %734 = vmatprep.mubr.bf16.mxu0 0
  %735 = vmatmul.mubr.bf16.gmra.mrb[0].mxu0 %v700
  %v736 = vpop.f32.mrb[0].mxu0
  %v737 = vadd.f32 %v672, %v736
  %v738 = vpop.f32.mrb[0].mxu0
  %v739 = vpop.f32.mrb[0].mxu0
  %v740 = vpop.f32.mrb[0].mxu0
  %741 = vdwg.mxu0
  %v742 = vmax.f32 %v737, 0.0
  %v743 = vld [vmem:[%s15] sm:$0x1]
  %v745 = vlaneseq
  %v746 = vshrl.u32 %v745, 7
  %v747 = vsub.s32 0, %v746
  %v748 = vrot.slane %v743, %v747
  %v750 = vmul.f32 %v742, %v748
  %vm751 = vcmask 261120
  %v752 = vsel %vm751, %v750, 0.0
  %753 = vadd.xlane.f32.xlu0 %v752
  %v754 = vpop.xlane.xlu0 %753
  %v755 = vld [vmem:[#allocation2] sm:$0x1]
  %v757 = vlaneseq
  %v758 = vshrl.u32 %v757, 7
  %v759 = vsub.s32 0, %v758
  %v760 = vrot.slane %v755, %v759
  %v762 = vadd.f32 %v754, %v760
  %vm763 = vcmask 7168
  %764 = vst.msk [vmem:[%s17] sm:$0xff] %vm763, %v762
  // Predicated region
  $region70: #{tpu_custom_call.1} parent=0 // pred_check
    _
  $region71: #{tpu_custom_call.1} parent=0 // pred_check_branch
    %766 = sbr.rel (0) target = $region73
  $region72: #{tpu_custom_call.1} parent=0 // pred_region
    _
  $region73: #{tpu_custom_call.1} parent=0 // pred_fallthru
    _
  // Predicated region
  $region74: #{tpu_custom_call.1} parent=0 // pred_check
    _
  $region75: #{tpu_custom_call.1} parent=0 // pred_check_branch
    %768 = sbr.rel (0) target = $region77
  $region76: #{tpu_custom_call.1} parent=0 // pred_region
    _
  $region77: #{tpu_custom_call.1} parent=0 // pred_fallthru
    _

</llo_original>
